<compile_context>
chip_gen: v5e
topology: v5e:2x2
jax: 0.10.0
libtpu: 0.0.40
codegen_flags: <defaults>
</compile_context>

<pallas_src>
import math
from functools import partial

import jax
import jax.numpy as jnp
from jax.experimental import pallas as pl
from jax.experimental.pallas import tpu as pltpu

CONFIG = {"k1_ratio": 1 / 9, "num_filters": 20, "n4": 100}


def _rup(x, m):
    return ((x + m - 1) // m) * m


# ----------------------------- Pallas kernel --------------------------------

def fused_forward_kernel(k2, x_ref, wbig_ref, bc_ref, w1_ref, b1_ref, w2_ref,
                         b2_ref, o_ref):
    """Fused conv1d (Toeplitz slab matmuls) + maxpool + tanh + fc1 + tanh + fc2.

    x_ref   : (TB, n1pad)          bf16 batch tile (zero-padded spectra)
    wbig_ref: (k2, n1pad, pfpad)   bf16 Toeplitz conv weight, one slab per pool offset
    bc_ref  : (1, pfpad)           f32 conv bias tiled to column order p*F+f (0 in pad)
    w1_ref  : (pfpad, n4pad)       bf16 permuted W1 (zero rows/cols in pad)
    b1_ref  : (1, n4pad)           f32
    w2_ref  : (n4pad, n5pad)       bf16
    b2_ref  : (1, n5pad)           f32
    o_ref   : (TB, n5pad)          f32
    """
    xb = x_ref[...]
    # Conv at every (pooled position p, filter f) for pool offset j is one
    # (TB, n1pad) @ (n1pad, pfpad) matmul; MaxPool1d(k2) is the running max
    # across the k2 slabs -> only one 896-wide slab + the running max are live.
    m = jnp.dot(xb, wbig_ref[0], preferred_element_type=jnp.float32)
    for j in range(1, k2):
        m = jnp.maximum(
            m, jnp.dot(xb, wbig_ref[j], preferred_element_type=jnp.float32))
    # Bias after max is exact (bias is a per-filter constant); then tanh.
    act = jnp.tanh(m + bc_ref[...]).astype(jnp.bfloat16)          # (TB, pfpad)
    h = jnp.tanh(
        jnp.dot(act, w1_ref[...], preferred_element_type=jnp.float32)
        + b1_ref[...]).astype(jnp.bfloat16)                       # (TB, n4pad)
    o_ref[...] = (jnp.dot(h, w2_ref[...], preferred_element_type=jnp.float32)
                  + b2_ref[...])


# ----------------------------- parameters -----------------------------------

def init_params(key, n1, n5):
    F = CONFIG["num_filters"]
    n4 = CONFIG["n4"]
    k1 = int(n1 * CONFIG["k1_ratio"])
    k2 = int(math.ceil(k1 / 5))
    Lc = n1 - k1 + 1              # conv output length
    P = Lc // k2                  # pooled length (floor mode)
    fc_in = F * P

    ks = jax.random.split(key, 6)
    u = lambda k, shape: jax.random.uniform(k, shape, jnp.float32, -0.05, 0.05)
    params = dict(
        Wc=u(ks[0], (F, k1)),      # Conv1d.weight (out_ch, in_ch=1 squeezed, k1)
        bc=u(ks[1], (F,)),         # Conv1d.bias
        W1=u(ks[2], (n4, fc_in)),  # Linear(fc_in, n4).weight (PyTorch: out, in)
        b1=u(ks[3], (n4,)),
        W2=u(ks[4], (n5, n4)),     # Linear(n4, n5).weight
        b2=u(ks[5], (n5,)),
    )
    dims = dict(n1=n1, k1=k1, k2=k2, Lc=Lc, P=P, F=F, n4=n4, n5=n5, fc_in=fc_in,
                pf=F * P,
                n1pad=_rup(n1, 128), pfpad=_rup(F * P, 128),
                n4pad=_rup(n4, 128), n5pad=_rup(n5, 128))
    return params, dims


def prepare_inference_params(params, dims):
    """One-time layout prep (arrays only -> jit-friendly pytree)."""
    n1, k1, k2, P, F = dims["n1"], dims["k1"], dims["k2"], dims["P"], dims["F"]
    n4, n5 = dims["n4"], dims["n5"]
    pf, pfpad = dims["pf"], dims["pfpad"]
    n1pad, n4pad, n5pad = dims["n1pad"], dims["n4pad"], dims["n5pad"]

    # Toeplitz expansion of the conv weight:
    #   wbig[j, i, p*F + f] = Wc[f, i - (p*k2 + j)]  if 0 <= i-(p*k2+j) < k1
    Wc_t = params["Wc"].T                                           # (k1, F)
    start = jnp.arange(P)[None, :] * k2 + jnp.arange(k2)[:, None]   # (k2, P)
    off = jnp.arange(n1)[:, None, None] - start[None]               # (n1, k2, P)
    valid = (off >= 0) & (off < k1)
    taps = Wc_t[jnp.clip(off, 0, k1 - 1), :]                        # (n1, k2, P, F)
    wbig = jnp.where(valid[..., None], taps, 0.0).reshape(n1, k2, pf)
    wbig = jnp.transpose(wbig, (1, 0, 2))                           # (k2, n1, pf)
    wbig = jnp.pad(wbig, ((0, 0), (0, n1pad - n1), (0, pfpad - pf)))

    # Channel-major flatten folded into W1: row p*F+f of w1 = W1.T row f*P+p.
    w1 = params["W1"].T.reshape(F, P, n4).transpose(1, 0, 2).reshape(pf, n4)
    w1 = jnp.pad(w1, ((0, pfpad - pf), (0, n4pad - n4)))   # zero pad rows+cols

    return dict(
        wbig=wbig.astype(jnp.bfloat16),
        bc=jnp.pad(jnp.tile(params["bc"], P),
                   (0, pfpad - pf)).reshape(1, pfpad),              # col p*F+f -> bc[f]
        w1=w1.astype(jnp.bfloat16),
        b1=jnp.pad(params["b1"], (0, n4pad - n4)).reshape(1, n4pad),
        w2=jnp.pad(params["W2"].T,
                   ((0, n4pad - n4), (0, n5pad - n5))).astype(jnp.bfloat16),
        b2=jnp.pad(params["b2"], (0, n5pad - n5)).reshape(1, n5pad),
    )


# ----------------------------- forward ---------------------------------------

def _pick_batch_tile(B):
    # Ragged / tiny batches: a single full-array tile is always legal.
    if B < 16 or B % 8 != 0:
        return B
    # Otherwise: >= 2 grid steps so both v7x TensorCores get work, with tiles as
    # large as possible (<= 256 rows, multiple of 8) to amortize the ~0.35us
    # per-step pipeline overhead on single-core v5e/v6e.  Per-step VMEM at 256
    # rows is ~4 MiB, well within every chip's scoped-VMEM default.
    tb = min(256, B // 2)
    tb -= tb % 8
    while tb > 8 and B % tb != 0:
        tb -= 8
    return tb if (tb >= 8 and B % tb == 0) else B


def forward(x, prep, dims):
    B = x.shape[0]
    n1, n5, k2 = dims["n1"], dims["n5"], dims["k2"]
    n1pad, pfpad = dims["n1pad"], dims["pfpad"]
    n4pad, n5pad = dims["n4pad"], dims["n5pad"]

    # (B, 1, n1) -> (B, n1pad) bf16: lane-dense rows and half the x DMA.
    x2 = jnp.pad(x.reshape(B, n1),
                 ((0, 0), (0, n1pad - n1))).astype(jnp.bfloat16)

    tb = _pick_batch_tile(B)
    grid = (B // tb,)

    def const2(shape):
        return pl.BlockSpec(shape, lambda i: (0, 0))

    def const3(shape):
        return pl.BlockSpec(shape, lambda i: (0, 0, 0))

    out = pl.pallas_call(
        partial(fused_forward_kernel, k2),
        grid=grid,
        in_specs=[
            pl.BlockSpec((tb, n1pad), lambda i: (i, 0)),   # batch tile of x
            const3((k2, n1pad, pfpad)),                    # Toeplitz conv weight
            const2((1, pfpad)),                            # tiled conv bias
            const2((pfpad, n4pad)),                        # permuted W1
            const2((1, n4pad)),                            # b1
            const2((n4pad, n5pad)),                        # W2^T
            const2((1, n5pad)),                            # b2
        ],
        out_specs=pl.BlockSpec((tb, n5pad), lambda i: (i, 0)),
        out_shape=jax.ShapeDtypeStruct((B, n5pad), jnp.float32),
        compiler_params=pltpu.CompilerParams(
            dimension_semantics=("parallel",),             # batch split on dual-TC chips
        ),
    )(x2, prep["wbig"], prep["bc"], prep["w1"], prep["b1"], prep["w2"], prep["b2"])
    # In-kernel store is lane-dense (B, 128); the cheap slice to n5 lives in XLA.
    return out[:, :n5]


# ----------------------------- pure-JAX reference ----------------------------

def reference(x, params, dims):
    B = x.shape[0]
    k2, P, F = dims["k2"], dims["P"], dims["F"]
    conv = jax.lax.conv_general_dilated(
        x, params["Wc"][:, None, :],
        window_strides=(1,), padding="VALID",
        dimension_numbers=("NCH", "OIH", "NCH"),
    ) + params["bc"][None, :, None]                                # (B, F, Lc)
    pooled = conv[:, :, :P * k2].reshape(B, F, P, k2).max(axis=-1)
    act = jnp.tanh(pooled)
    flat = act.reshape(B, F * P)                                   # channel-major
    h = jnp.tanh(flat @ params["W1"].T + params["b1"])
    return h @ params["W2"].T + params["b2"]


# ----------------------------- main -------------------------------------------

if __name__ == "__main__":
    n1, n5 = 90, 5            # spectral length, number of classes
    key = jax.random.PRNGKey(0)
    kp, kx, kx2 = jax.random.split(key, 3)
    params, dims = init_params(kp, n1, n5)
    prep = prepare_inference_params(params, dims)

    fwd = jax.jit(partial(forward, dims=dims))

    # bf16 matmul operands (f32 accumulation) -> relax tolerance vs f32 reference.
    TOL = dict(atol=3e-2, rtol=3e-2)

    # Small batch, PyTorch input layout (B, 1, n1) -> single full-array tile.
    B = 2
    x = jax.random.normal(kx, (B, 1, n1), jnp.float32)
    out = jax.block_until_ready(fwd(x, prep))
    ref = reference(x, params, dims)
    assert out.shape == (B, n5), out.shape
    assert jnp.allclose(out, ref, **TOL)

    # Larger batch to exercise the tiled, "parallel" grid path (grid=(2,)).
    B2 = 256
    xb = jax.random.normal(kx2, (B2, 1, n1), jnp.float32)
    outb = jax.block_until_ready(fwd(xb, prep))
    refb = reference(xb, params, dims)
    assert outb.shape == (B2, n5), outb.shape
    assert jnp.allclose(outb, refb, **TOL)

    print("KERNEL_OK")
</pallas_src>

<mosaic_0001>
module attributes {stable_mosaic.version = 11 : i64} {
  func.func @fused_forward_kernel(%arg0: i32, %arg1: memref<2x128xbf16, #tpu.memory_space<vmem>>, %arg2: memref<2x128x896xbf16, #tpu.memory_space<vmem>>, %arg3: memref<1x896xf32, #tpu.memory_space<vmem>>, %arg4: memref<896x128xbf16, #tpu.memory_space<vmem>>, %arg5: memref<1x128xf32, #tpu.memory_space<vmem>>, %arg6: memref<128x128xbf16, #tpu.memory_space<vmem>>, %arg7: memref<1x128xf32, #tpu.memory_space<vmem>>, %arg8: memref<2x128xf32, #tpu.memory_space<vmem>>) attributes {dimension_semantics = [#tpu.dimension_semantics<parallel>], iteration_bounds = array<i64: 1>, scalar_prefetch = 0 : i64, scratch_operands = 0 : i64, tpu.core_type = #tpu.core_type<tc>, window_params = [{transform_indices = @transform_0, window_bounds = array<i64: 2, 128>}, {pipeline_mode = #tpu.pipeline_mode<synchronous>, transform_indices = @transform_1, window_bounds = array<i64: 2, 128, 896>}, {pipeline_mode = #tpu.pipeline_mode<synchronous>, transform_indices = @transform_2, window_bounds = array<i64: 1, 896>}, {pipeline_mode = #tpu.pipeline_mode<synchronous>, transform_indices = @transform_3, window_bounds = array<i64: 896, 128>}, {pipeline_mode = #tpu.pipeline_mode<synchronous>, transform_indices = @transform_4, window_bounds = array<i64: 1, 128>}, {pipeline_mode = #tpu.pipeline_mode<synchronous>, transform_indices = @transform_5, window_bounds = array<i64: 128, 128>}, {pipeline_mode = #tpu.pipeline_mode<synchronous>, transform_indices = @transform_6, window_bounds = array<i64: 1, 128>}, {transform_indices = @transform_7, window_bounds = array<i64: 2, 128>}]} {
    %c0 = arith.constant 0 : index
    %c0_0 = arith.constant 0 : index
    %0 = vector.load %arg1[%c0, %c0_0] : memref<2x128xbf16, #tpu.memory_space<vmem>>, vector<2x128xbf16>
    %c0_1 = arith.constant 0 : index
    %c0_2 = arith.constant 0 : index
    %c0_3 = arith.constant 0 : index
    %1 = vector.load %arg2[%c0_1, %c0_2, %c0_3] : memref<2x128x896xbf16, #tpu.memory_space<vmem>>, vector<1x128x896xbf16>
    %2 = vector.shape_cast %1 : vector<1x128x896xbf16> to vector<128x896xbf16>
    %cst = arith.constant dense<0.000000e+00> : vector<2x896xf32>
    %3 = tpu.matmul %0, %2, %cst {dimension_numbers = #tpu.dot_dimension_numbers<[1], [0], [0], [1], [0, 0, 1, 1], [], []>} : vector<2x128xbf16>, vector<128x896xbf16>, vector<2x896xf32> -> vector<2x896xf32>
    %c1 = arith.constant 1 : index
    %c0_4 = arith.constant 0 : index
    %c0_5 = arith.constant 0 : index
    %4 = vector.load %arg2[%c1, %c0_4, %c0_5] : memref<2x128x896xbf16, #tpu.memory_space<vmem>>, vector<1x128x896xbf16>
    %5 = vector.shape_cast %4 : vector<1x128x896xbf16> to vector<128x896xbf16>
    %cst_6 = arith.constant dense<0.000000e+00> : vector<2x896xf32>
    %6 = tpu.matmul %0, %5, %cst_6 {dimension_numbers = #tpu.dot_dimension_numbers<[1], [0], [0], [1], [0, 0, 1, 1], [], []>} : vector<2x128xbf16>, vector<128x896xbf16>, vector<2x896xf32> -> vector<2x896xf32>
    %7 = arith.maximumf %3, %6 : vector<2x896xf32>
    %c0_7 = arith.constant 0 : index
    %c0_8 = arith.constant 0 : index
    %8 = vector.load %arg3[%c0_7, %c0_8] : memref<1x896xf32, #tpu.memory_space<vmem>>, vector<1x896xf32>
    %9 = vector.broadcast %8 : vector<1x896xf32> to vector<2x896xf32>
    %10 = arith.addf %7, %9 : vector<2x896xf32>
    %11 = math.tanh %10 : vector<2x896xf32>
    %12 = arith.truncf %11 : vector<2x896xf32> to vector<2x896xbf16>
    %c0_9 = arith.constant 0 : index
    %c0_10 = arith.constant 0 : index
    %13 = vector.load %arg4[%c0_9, %c0_10] : memref<896x128xbf16, #tpu.memory_space<vmem>>, vector<896x128xbf16>
    %cst_11 = arith.constant dense<0.000000e+00> : vector<2x128xf32>
    %14 = tpu.matmul %12, %13, %cst_11 {dimension_numbers = #tpu.dot_dimension_numbers<[1], [0], [0], [1], [0, 0, 1, 1], [], []>} : vector<2x896xbf16>, vector<896x128xbf16>, vector<2x128xf32> -> vector<2x128xf32>
    %c0_12 = arith.constant 0 : index
    %c0_13 = arith.constant 0 : index
    %15 = vector.load %arg5[%c0_12, %c0_13] : memref<1x128xf32, #tpu.memory_space<vmem>>, vector<1x128xf32>
    %16 = vector.broadcast %15 : vector<1x128xf32> to vector<2x128xf32>
    %17 = arith.addf %14, %16 : vector<2x128xf32>
    %18 = math.tanh %17 : vector<2x128xf32>
    %19 = arith.truncf %18 : vector<2x128xf32> to vector<2x128xbf16>
    %c0_14 = arith.constant 0 : index
    %c0_15 = arith.constant 0 : index
    %20 = vector.load %arg6[%c0_14, %c0_15] : memref<128x128xbf16, #tpu.memory_space<vmem>>, vector<128x128xbf16>
    %cst_16 = arith.constant dense<0.000000e+00> : vector<2x128xf32>
    %21 = tpu.matmul %19, %20, %cst_16 {dimension_numbers = #tpu.dot_dimension_numbers<[1], [0], [0], [1], [0, 0, 1, 1], [], []>} : vector<2x128xbf16>, vector<128x128xbf16>, vector<2x128xf32> -> vector<2x128xf32>
    %c0_17 = arith.constant 0 : index
    %c0_18 = arith.constant 0 : index
    %22 = vector.load %arg7[%c0_17, %c0_18] : memref<1x128xf32, #tpu.memory_space<vmem>>, vector<1x128xf32>
    %23 = vector.broadcast %22 : vector<1x128xf32> to vector<2x128xf32>
    %24 = arith.addf %21, %23 : vector<2x128xf32>
    %c0_19 = arith.constant 0 : index
    %c0_20 = arith.constant 0 : index
    %25 = vector.load %arg8[%c0_19, %c0_20] : memref<2x128xf32, #tpu.memory_space<vmem>>, vector<2x128xf32>
    tpu.vector_store %arg8[%c0_19, %c0_20], %24 {strides = array<i32>} : memref<2x128xf32, #tpu.memory_space<vmem>>, vector<2x128xf32>,
    return
  }
  func.func @transform_0(%arg0: i32) -> (i32, i32) {
    %c0_i32 = arith.constant 0 : i32
    %c0_i32_0 = arith.constant 0 : i32
    return %arg0, %c0_i32 : i32, i32
  }
  func.func @transform_1(%arg0: i32) -> (i32, i32, i32) {
    %c0_i32 = arith.constant 0 : i32
    %c0_i32_0 = arith.constant 0 : i32
    %c0_i32_1 = arith.constant 0 : i32
    %c0_i32_2 = arith.constant 0 : i32
    return %c0_i32, %c0_i32_0, %c0_i32_1 : i32, i32, i32
  }
  func.func @transform_2(%arg0: i32) -> (i32, i32) {
    %c0_i32 = arith.constant 0 : i32
    %c0_i32_0 = arith.constant 0 : i32
    %c0_i32_1 = arith.constant 0 : i32
    return %c0_i32, %c0_i32_0 : i32, i32
  }
  func.func @transform_3(%arg0: i32) -> (i32, i32) {
    %c0_i32 = arith.constant 0 : i32
    %c0_i32_0 = arith.constant 0 : i32
    %c0_i32_1 = arith.constant 0 : i32
    return %c0_i32, %c0_i32_0 : i32, i32
  }
  func.func @transform_4(%arg0: i32) -> (i32, i32) {
    %c0_i32 = arith.constant 0 : i32
    %c0_i32_0 = arith.constant 0 : i32
    %c0_i32_1 = arith.constant 0 : i32
    return %c0_i32, %c0_i32_0 : i32, i32
  }
  func.func @transform_5(%arg0: i32) -> (i32, i32) {
    %c0_i32 = arith.constant 0 : i32
    %c0_i32_0 = arith.constant 0 : i32
    %c0_i32_1 = arith.constant 0 : i32
    return %c0_i32, %c0_i32_0 : i32, i32
  }
  func.func @transform_6(%arg0: i32) -> (i32, i32) {
    %c0_i32 = arith.constant 0 : i32
    %c0_i32_0 = arith.constant 0 : i32
    %c0_i32_1 = arith.constant 0 : i32
    return %c0_i32, %c0_i32_0 : i32, i32
  }
  func.func @transform_7(%arg0: i32) -> (i32, i32) {
    %c0_i32 = arith.constant 0 : i32
    %c0_i32_0 = arith.constant 0 : i32
    return %arg0, %c0_i32 : i32, i32
  }
}

</mosaic_0001>

<llo_original>
// kernel: forward.1
$region0: #{forward.1}
  #allocation0 [shape = 'u32[]', space=smem, size = 0x4, offset = 0x4, fixed_abs, tag = 'smem constant byte address 0x4 - core index']
  #allocation1 [shape = 'u32[72,128]{1,0:T(1,128)}', space=vmem, size = 0x9000, scoped, tag = 'internal scratch']
  %s0 = inlined_call_operand.vmem [shape: bf16[2,128], index: 0, kind: input, shape index: {}]
  %s1 = inlined_call_operand.hbm [shape: bf16[2,128,896], index: 1, kind: input, shape index: {}]
  %s2 = inlined_call_operand.vmem [shape: f32[1,896], index: 2, kind: input, shape index: {}]
  %s3 = inlined_call_operand.hbm [shape: bf16[896,128], index: 3, kind: input, shape index: {}]
  %s4 = inlined_call_operand.vmem [shape: f32[1,128], index: 4, kind: input, shape index: {}]
  %s5 = inlined_call_operand.hbm [shape: bf16[128,128], index: 5, kind: input, shape index: {}]
  %s6 = inlined_call_operand.vmem [shape: f32[1,128], index: 6, kind: input, shape index: {}]
  %s7 = inlined_call_operand.hbm [shape: f32[2,128], index: 7, kind: output, shape index: {}]
  %s8 = sld [smem:[#allocation0]]
  $region50: #{forward.1} parent=0
    _
  %s10 = ssub.s32 1, %s8
  %s11 = scalar_select 0, %s10, %s8
  $region1: #{forward.1} parent=0
    #allocation2 [shape = 'u8[458752]{0}', space=vmem, size = 0x70000, scoped, tag = 'input window, operand 1, single buffered']
    #allocation3 [shape = 's32[1]{0}', space=sflag, size = 0x4, scoped, tag = 'scoped memory for forward.1']
    #allocation4 [shape = 's32[1]{0}', space=sflag, size = 0x4, scoped, tag = 'scoped memory for forward.1']
    #allocation5 [shape = 'u8[229376]{0}', space=vmem, size = 0x38000, scoped, tag = 'input window, operand 3, single buffered']
    #allocation6 [shape = 's32[1]{0}', space=sflag, size = 0x4, scoped, tag = 'scoped memory for forward.1']
    #allocation7 [shape = 'u8[32768]{0}', space=vmem, size = 0x8000, scoped, tag = 'input window, operand 5, single buffered']
    #allocation8 [shape = 'u8[1024]{0}', space=vmem, size = 0x400, scoped, tag = 'output window, operand 0, single buffered']
    %12 = vsyncpa [#allocation3], 0
    %13 = vsyncpa [#allocation6], 0
    %14 = vsyncpa [#allocation4], 0
    // Predicated region
    $region2: #{forward.1} parent=1 // pred_check
      _
    $region3: #{forward.1} parent=1 // pred_check_branch
      %16 = sbr.rel (0) target = $region5
    $region4: #{forward.1} parent=1 // pred_region
      _
    $region5: #{forward.1} parent=1 // pred_fallthru
      _
    // Predicated region
    $region6: #{forward.1} parent=1 // pred_check
      _
    $region7: #{forward.1} parent=1 // pred_check_branch
      %18 = sbr.rel (0) target = $region9
    $region8: #{forward.1} parent=1 // pred_region
      %20 = vsyncadd [#allocation3], 0
      %s21 = sshll.u32 %s1, 4
      %s22 = int_to_ptr.hbm [resolvable:$true] %s21
      %s23 = sshll.u32 [#allocation2], 4
      %s24 = int_to_ptr.vmem [resolvable:$true] %s23
      %29 = dma.hbm_to_vmem [thread:$0]  %s22, 14336, %s24, [#allocation3], 448, 448, 28
    $region9: #{forward.1} parent=1 // pred_fallthru
      _
    // Predicated region
    $region10: #{forward.1} parent=1 // pred_check
      _
    $region11: #{forward.1} parent=1 // pred_check_branch
      %31 = sbr.rel (0) target = $region13
    $region12: #{forward.1} parent=1 // pred_region
      _
    $region13: #{forward.1} parent=1 // pred_fallthru
      _
    // Predicated region
    $region14: #{forward.1} parent=1 // pred_check
      _
    $region15: #{forward.1} parent=1 // pred_check_branch
      %33 = sbr.rel (0) target = $region17
    $region16: #{forward.1} parent=1 // pred_region
      %35 = vsyncadd [#allocation6], 0
      %s36 = sshll.u32 %s3, 4
      %s37 = int_to_ptr.hbm [resolvable:$true] %s36
      %s38 = sshll.u32 [#allocation5], 4
      %s39 = int_to_ptr.vmem [resolvable:$true] %s38
      %44 = dma.hbm_to_vmem [thread:$0]  %s37, 7168, %s39, [#allocation6], 64, 64, 4
    $region17: #{forward.1} parent=1 // pred_fallthru
      _
    // Predicated region
    $region18: #{forward.1} parent=1 // pred_check
      _
    $region19: #{forward.1} parent=1 // pred_check_branch
      %46 = sbr.rel (0) target = $region21
    $region20: #{forward.1} parent=1 // pred_region
      _
    $region21: #{forward.1} parent=1 // pred_fallthru
      _
    // Predicated region
    $region22: #{forward.1} parent=1 // pred_check
      _
    $region23: #{forward.1} parent=1 // pred_check_branch
      %48 = sbr.rel (0) target = $region25
    $region24: #{forward.1} parent=1 // pred_region
      %50 = vsyncadd [#allocation6], 0
      %s51 = sshll.u32 %s5, 4
      %s52 = int_to_ptr.hbm [resolvable:$true] %s51
      %s53 = sshll.u32 [#allocation7], 4
      %s54 = int_to_ptr.vmem [resolvable:$true] %s53
      %59 = dma.hbm_to_vmem [thread:$0]  %s52, 1024, %s54, [#allocation6], 64, 64, 4
    $region25: #{forward.1} parent=1 // pred_fallthru
      _
    // Predicated region
    $region26: #{forward.1} parent=1 // pred_check
      _
    $region27: #{forward.1} parent=1 // pred_check_branch
      %61 = sbr.rel (0) target = $region29
    $region28: #{forward.1} parent=1 // pred_region
      _
    $region29: #{forward.1} parent=1 // pred_fallthru
      _
    // Predicated region
    $region30: #{forward.1} parent=1 // pred_check
      _
    $region31: #{forward.1} parent=1 // pred_check_branch
      %63 = sbr.rel (0) target = $region33
    $region32: #{forward.1} parent=1 // pred_region
      %65 = dma.done [#allocation3], 14336
    $region33: #{forward.1} parent=1 // pred_fallthru
      _
    // Predicated region
    $region34: #{forward.1} parent=1 // pred_check
      _
    $region35: #{forward.1} parent=1 // pred_check_branch
      %67 = sbr.rel (0) target = $region37
    $region36: #{forward.1} parent=1 // pred_region
      %69 = dma.done [#allocation6], 7168
    $region37: #{forward.1} parent=1 // pred_fallthru
      _
    // Predicated region
    $region38: #{forward.1} parent=1 // pred_check
      _
    $region39: #{forward.1} parent=1 // pred_check_branch
      %71 = sbr.rel (0) target = $region41
    $region40: #{forward.1} parent=1 // pred_region
      %73 = dma.done [#allocation6], 1024
    $region41: #{forward.1} parent=1 // pred_fallthru
      _
    %v74 = vld [vmem:[%s0] sm:$0x1]
    %v75 = vld [vmem:[#allocation2] sm:$0xff]
    %v76 = vld [vmem:[#allocation2 + $0x8] sm:$0xff]
    %v77 = vld [vmem:[#allocation2 + $0x10] sm:$0xff]
    %v78 = vld [vmem:[#allocation2 + $0x18] sm:$0xf]
    %v79 = vld [vmem:[#allocation2 + $0x1c] sm:$0xff]
    %v80 = vld [vmem:[#allocation2 + $0x24] sm:$0xff]
    %v81 = vld [vmem:[#allocation2 + $0x2c] sm:$0xff]
    %v82 = vld [vmem:[#allocation2 + $0x34] sm:$0xf]
    %v83 = vld [vmem:[#allocation2 + $0x38] sm:$0xff]
    %v84 = vld [vmem:[#allocation2 + $0x40] sm:$0xff]
    %v85 = vld [vmem:[#allocation2 + $0x48] sm:$0xff]
    %v86 = vld [vmem:[#allocation2 + $0x50] sm:$0xf]
    %v87 = vld [vmem:[#allocation2 + $0x54] sm:$0xff]
    %v88 = vld [vmem:[#allocation2 + $0x5c] sm:$0xff]
    %v89 = vld [vmem:[#allocation2 + $0x64] sm:$0xff]
    %v90 = vld [vmem:[#allocation2 + $0x6c] sm:$0xf]
    %v91 = vld [vmem:[#allocation2 + $0x70] sm:$0xff]
    %v92 = vld [vmem:[#allocation2 + $0x78] sm:$0xff]
    %v93 = vld [vmem:[#allocation2 + $0x80] sm:$0xff]
    %v94 = vld [vmem:[#allocation2 + $0x88] sm:$0xf]
    %v95 = vld [vmem:[#allocation2 + $0x8c] sm:$0xff]
    %v96 = vld [vmem:[#allocation2 + $0x94] sm:$0xff]
    %v97 = vld [vmem:[#allocation2 + $0x9c] sm:$0xff]
    %v98 = vld [vmem:[#allocation2 + $0xa4] sm:$0xf]
    %v99 = vld [vmem:[#allocation2 + $0xa8] sm:$0xff]
    %v100 = vld [vmem:[#allocation2 + $0xb0] sm:$0xff]
    %v101 = vld [vmem:[#allocation2 + $0xb8] sm:$0xff]
    %v102 = vld [vmem:[#allocation2 + $0xc0] sm:$0xf]
    %v103 = vld [vmem:[#allocation2 + $0xc4] sm:$0xff]
    %v104 = vld [vmem:[#allocation2 + $0xcc] sm:$0xff]
    %v105 = vld [vmem:[#allocation2 + $0xd4] sm:$0xff]
    %v106 = vld [vmem:[#allocation2 + $0xdc] sm:$0xf]
    %v107 = vld [vmem:[#allocation2 + $0xe0] sm:$0xff]
    %v108 = vld [vmem:[#allocation2 + $0xe8] sm:$0xff]
    %v109 = vld [vmem:[#allocation2 + $0xf0] sm:$0xff]
    %v110 = vld [vmem:[#allocation2 + $0xf8] sm:$0xf]
    %v111 = vld [vmem:[#allocation2 + $0xfc] sm:$0xff]
    %v112 = vld [vmem:[#allocation2 + $0x104] sm:$0xff]
    %v113 = vld [vmem:[#allocation2 + $0x10c] sm:$0xff]
    %v114 = vld [vmem:[#allocation2 + $0x114] sm:$0xf]
    %v115 = vld [vmem:[#allocation2 + $0x118] sm:$0xff]
    %v116 = vld [vmem:[#allocation2 + $0x120] sm:$0xff]
    %v117 = vld [vmem:[#allocation2 + $0x128] sm:$0xff]
    %v118 = vld [vmem:[#allocation2 + $0x130] sm:$0xf]
    %v119 = vld [vmem:[#allocation2 + $0x134] sm:$0xff]
    %v120 = vld [vmem:[#allocation2 + $0x13c] sm:$0xff]
    %v121 = vld [vmem:[#allocation2 + $0x144] sm:$0xff]
    %v122 = vld [vmem:[#allocation2 + $0x14c] sm:$0xf]
    %v123 = vld [vmem:[#allocation2 + $0x150] sm:$0xff]
    %v124 = vld [vmem:[#allocation2 + $0x158] sm:$0xff]
    %v125 = vld [vmem:[#allocation2 + $0x160] sm:$0xff]
    %v126 = vld [vmem:[#allocation2 + $0x168] sm:$0xf]
    %v127 = vld [vmem:[#allocation2 + $0x16c] sm:$0xff]
    %v128 = vld [vmem:[#allocation2 + $0x174] sm:$0xff]
    %v129 = vld [vmem:[#allocation2 + $0x17c] sm:$0xff]
    %v130 = vld [vmem:[#allocation2 + $0x184] sm:$0xf]
    %v131 = vld [vmem:[#allocation2 + $0x188] sm:$0xff]
    %v132 = vld [vmem:[#allocation2 + $0x190] sm:$0xff]
    %v133 = vld [vmem:[#allocation2 + $0x198] sm:$0xff]
    %v134 = vld [vmem:[#allocation2 + $0x1a0] sm:$0xf]
    %v135 = vld [vmem:[#allocation2 + $0x1a4] sm:$0xff]
    %v136 = vld [vmem:[#allocation2 + $0x1ac] sm:$0xff]
    %v137 = vld [vmem:[#allocation2 + $0x1b4] sm:$0xff]
    %v138 = vld [vmem:[#allocation2 + $0x1bc] sm:$0xf]
    %v203 = vunpack.c.l.b16 %v75
    %v204 = vunpack.c.h.b16 %v75
    %v205 = vunpack.c.l.b16 %v76
    %v206 = vunpack.c.h.b16 %v76
    %v207 = vunpack.c.l.b16 %v77
    %v208 = vunpack.c.h.b16 %v77
    %v209 = vunpack.c.l.b16 %v78
    %v210 = vunpack.c.l.b16 %v79
    %v211 = vunpack.c.h.b16 %v79
    %v212 = vunpack.c.l.b16 %v80
    %v213 = vunpack.c.h.b16 %v80
    %v214 = vunpack.c.l.b16 %v81
    %v215 = vunpack.c.h.b16 %v81
    %v216 = vunpack.c.l.b16 %v82
    %v217 = vunpack.c.l.b16 %v83
    %v218 = vunpack.c.h.b16 %v83
    %v219 = vunpack.c.l.b16 %v84
    %v220 = vunpack.c.h.b16 %v84
    %v221 = vunpack.c.l.b16 %v85
    %v222 = vunpack.c.h.b16 %v85
    %v223 = vunpack.c.l.b16 %v86
    %v224 = vunpack.c.l.b16 %v87
    %v225 = vunpack.c.h.b16 %v87
    %v226 = vunpack.c.l.b16 %v88
    %v227 = vunpack.c.h.b16 %v88
    %v228 = vunpack.c.l.b16 %v89
    %v229 = vunpack.c.h.b16 %v89
    %v230 = vunpack.c.l.b16 %v90
    %v231 = vunpack.c.l.b16 %v91
    %v232 = vunpack.c.h.b16 %v91
    %v233 = vunpack.c.l.b16 %v92
    %v234 = vunpack.c.h.b16 %v92
    %v235 = vunpack.c.l.b16 %v93
    %v236 = vunpack.c.h.b16 %v93
    %v237 = vunpack.c.l.b16 %v94
    %v238 = vunpack.c.l.b16 %v95
    %v239 = vunpack.c.h.b16 %v95
    %v240 = vunpack.c.l.b16 %v96
    %v241 = vunpack.c.h.b16 %v96
    %v242 = vunpack.c.l.b16 %v97
    %v243 = vunpack.c.h.b16 %v97
    %v244 = vunpack.c.l.b16 %v98
    %v245 = vunpack.c.l.b16 %v99
    %v246 = vunpack.c.h.b16 %v99
    %v247 = vunpack.c.l.b16 %v100
    %v248 = vunpack.c.h.b16 %v100
    %v249 = vunpack.c.l.b16 %v101
    %v250 = vunpack.c.h.b16 %v101
    %v251 = vunpack.c.l.b16 %v102
    %v252 = vunpack.c.l.b16 %v103
    %v253 = vunpack.c.h.b16 %v103
    %v254 = vunpack.c.l.b16 %v104
    %v255 = vunpack.c.h.b16 %v104
    %v256 = vunpack.c.l.b16 %v105
    %v257 = vunpack.c.h.b16 %v105
    %v258 = vunpack.c.l.b16 %v106
    %v259 = vunpack.c.l.b16 %v107
    %v260 = vunpack.c.h.b16 %v107
    %v261 = vunpack.c.l.b16 %v108
    %v262 = vunpack.c.h.b16 %v108
    %v263 = vunpack.c.l.b16 %v109
    %v264 = vunpack.c.h.b16 %v109
    %v265 = vunpack.c.l.b16 %v110
    %v266 = vunpack.c.l.b16 %v111
    %v267 = vunpack.c.h.b16 %v111
    %v268 = vunpack.c.l.b16 %v112
    %v269 = vunpack.c.h.b16 %v112
    %v270 = vunpack.c.l.b16 %v113
    %v271 = vunpack.c.h.b16 %v113
    %v272 = vunpack.c.l.b16 %v114
    %v273 = vunpack.c.l.b16 %v115
    %v274 = vunpack.c.h.b16 %v115
    %v275 = vunpack.c.l.b16 %v116
    %v276 = vunpack.c.h.b16 %v116
    %v277 = vunpack.c.l.b16 %v117
    %v278 = vunpack.c.h.b16 %v117
    %v279 = vunpack.c.l.b16 %v118
    %v280 = vunpack.c.l.b16 %v119
    %v281 = vunpack.c.h.b16 %v119
    %v282 = vunpack.c.l.b16 %v120
    %v283 = vunpack.c.h.b16 %v120
    %v284 = vunpack.c.l.b16 %v121
    %v285 = vunpack.c.h.b16 %v121
    %v286 = vunpack.c.l.b16 %v122
    %v287 = vunpack.c.l.b16 %v123
    %v288 = vunpack.c.h.b16 %v123
    %v289 = vunpack.c.l.b16 %v124
    %v290 = vunpack.c.h.b16 %v124
    %v291 = vunpack.c.l.b16 %v125
    %v292 = vunpack.c.h.b16 %v125
    %v293 = vunpack.c.l.b16 %v126
    %v294 = vunpack.c.l.b16 %v127
    %v295 = vunpack.c.h.b16 %v127
    %v296 = vunpack.c.l.b16 %v128
    %v297 = vunpack.c.h.b16 %v128
    %v298 = vunpack.c.l.b16 %v129
    %v299 = vunpack.c.h.b16 %v129
    %v300 = vunpack.c.l.b16 %v130
    %v301 = vunpack.c.l.b16 %v131
    %v302 = vunpack.c.h.b16 %v131
    %v303 = vunpack.c.l.b16 %v132
    %v304 = vunpack.c.h.b16 %v132
    %v305 = vunpack.c.l.b16 %v133
    %v306 = vunpack.c.h.b16 %v133
    %v307 = vunpack.c.l.b16 %v134
    %v308 = vunpack.c.l.b16 %v135
    %v309 = vunpack.c.h.b16 %v135
    %v310 = vunpack.c.l.b16 %v136
    %v311 = vunpack.c.h.b16 %v136
    %v312 = vunpack.c.l.b16 %v137
    %v313 = vunpack.c.h.b16 %v137
    %v314 = vunpack.c.l.b16 %v138
    %v315 = vpack.c.b16 %v210, %v203
    %v316 = vpack.c.b16 %v211, %v204
    %v317 = vpack.c.b16 %v212, %v205
    %v318 = vpack.c.b16 %v213, %v206
    %v319 = vpack.c.b16 %v214, %v207
    %v320 = vpack.c.b16 %v215, %v208
    %v321 = vpack.c.b16 %v216, %v209
    %v322 = vpack.c.b16 %v224, %v217
    %v323 = vpack.c.b16 %v225, %v218
    %v324 = vpack.c.b16 %v226, %v219
    %v325 = vpack.c.b16 %v227, %v220
    %v326 = vpack.c.b16 %v228, %v221
    %v327 = vpack.c.b16 %v229, %v222
    %v328 = vpack.c.b16 %v230, %v223
    %v329 = vpack.c.b16 %v238, %v231
    %v330 = vpack.c.b16 %v239, %v232
    %v331 = vpack.c.b16 %v240, %v233
    %v332 = vpack.c.b16 %v241, %v234
    %v333 = vpack.c.b16 %v242, %v235
    %v334 = vpack.c.b16 %v243, %v236
    %v335 = vpack.c.b16 %v244, %v237
    %v336 = vpack.c.b16 %v252, %v245
    %v337 = vpack.c.b16 %v253, %v246
    %v338 = vpack.c.b16 %v254, %v247
    %v339 = vpack.c.b16 %v255, %v248
    %v340 = vpack.c.b16 %v256, %v249
    %v341 = vpack.c.b16 %v257, %v250
    %v342 = vpack.c.b16 %v258, %v251
    %v343 = vpack.c.b16 %v266, %v259
    %v344 = vpack.c.b16 %v267, %v260
    %v345 = vpack.c.b16 %v268, %v261
    %v346 = vpack.c.b16 %v269, %v262
    %v347 = vpack.c.b16 %v270, %v263
    %v348 = vpack.c.b16 %v271, %v264
    %v349 = vpack.c.b16 %v272, %v265
    %v350 = vpack.c.b16 %v280, %v273
    %v351 = vpack.c.b16 %v281, %v274
    %v352 = vpack.c.b16 %v282, %v275
    %v353 = vpack.c.b16 %v283, %v276
    %v354 = vpack.c.b16 %v284, %v277
    %v355 = vpack.c.b16 %v285, %v278
    %v356 = vpack.c.b16 %v286, %v279
    %v357 = vpack.c.b16 %v294, %v287
    %v358 = vpack.c.b16 %v295, %v288
    %v359 = vpack.c.b16 %v296, %v289
    %v360 = vpack.c.b16 %v297, %v290
    %v361 = vpack.c.b16 %v298, %v291
    %v362 = vpack.c.b16 %v299, %v292
    %v363 = vpack.c.b16 %v300, %v293
    %v364 = vpack.c.b16 %v308, %v301
    %v365 = vpack.c.b16 %v309, %v302
    %v366 = vpack.c.b16 %v310, %v303
    %v367 = vpack.c.b16 %v311, %v304
    %v368 = vpack.c.b16 %v312, %v305
    %v369 = vpack.c.b16 %v313, %v306
    %v370 = vpack.c.b16 %v314, %v307
    %427 = vmatpush.bf16.msra.mxu0 %v364
    %428 = vmatpush.bf16.msra.mxu0 %v357
    %429 = vmatpush.bf16.msra.mxu0 %v350
    %430 = vmatpush.bf16.msra.mxu0 %v343
    %431 = vmatpush.bf16.msra.mxu0 %v336
    %432 = vmatpush.bf16.msra.mxu0 %v329
    %433 = vmatpush.bf16.msra.mxu0 %v322
    %434 = vmatpush.bf16.msra.mxu0 %v315
    %435 = vmatmul.bf16.gmra.mxu0 %v74
    %v436 = vpop.f32.mrf.mxu0
    %v437 = vadd.f32 0.0, %v436
    %v438 = vpop.f32.mrf.mxu0
    %439 = vdwg.mxu0
    %440 = vmatpush.bf16.msra.mxu0 %v365
    %441 = vmatpush.bf16.msra.mxu0 %v358
    %442 = vmatpush.bf16.msra.mxu0 %v351
    %443 = vmatpush.bf16.msra.mxu0 %v344
    %444 = vmatpush.bf16.msra.mxu0 %v337
    %445 = vmatpush.bf16.msra.mxu0 %v330
    %446 = vmatpush.bf16.msra.mxu0 %v323
    %447 = vmatpush.bf16.msra.mxu0 %v316
    %448 = vmatmul.bf16.gmra.mxu0 %v74
    %v449 = vpop.f32.mrf.mxu0
    %v450 = vadd.f32 0.0, %v449
    %v451 = vpop.f32.mrf.mxu0
    %452 = vdwg.mxu0
    %453 = vmatpush.bf16.msra.mxu0 %v366
    %454 = vmatpush.bf16.msra.mxu0 %v359
    %455 = vmatpush.bf16.msra.mxu0 %v352
    %456 = vmatpush.bf16.msra.mxu0 %v345
    %457 = vmatpush.bf16.msra.mxu0 %v338
    %458 = vmatpush.bf16.msra.mxu0 %v331
    %459 = vmatpush.bf16.msra.mxu0 %v324
    %460 = vmatpush.bf16.msra.mxu0 %v317
    %461 = vmatmul.bf16.gmra.mxu0 %v74
    %v462 = vpop.f32.mrf.mxu0
    %v463 = vadd.f32 0.0, %v462
    %v464 = vpop.f32.mrf.mxu0
    %465 = vdwg.mxu0
    %466 = vmatpush.bf16.msra.mxu0 %v367
    %467 = vmatpush.bf16.msra.mxu0 %v360
    %468 = vmatpush.bf16.msra.mxu0 %v353
    %469 = vmatpush.bf16.msra.mxu0 %v346
    %470 = vmatpush.bf16.msra.mxu0 %v339
    %471 = vmatpush.bf16.msra.mxu0 %v332
    %472 = vmatpush.bf16.msra.mxu0 %v325
    %473 = vmatpush.bf16.msra.mxu0 %v318
    %474 = vmatmul.bf16.gmra.mxu0 %v74
    %v475 = vpop.f32.mrf.mxu0
    %v476 = vadd.f32 0.0, %v475
    %v477 = vpop.f32.mrf.mxu0
    %478 = vdwg.mxu0
    %479 = vmatpush.bf16.msra.mxu0 %v368
    %480 = vmatpush.bf16.msra.mxu0 %v361
    %481 = vmatpush.bf16.msra.mxu0 %v354
    %482 = vmatpush.bf16.msra.mxu0 %v347
    %483 = vmatpush.bf16.msra.mxu0 %v340
    %484 = vmatpush.bf16.msra.mxu0 %v333
    %485 = vmatpush.bf16.msra.mxu0 %v326
    %486 = vmatpush.bf16.msra.mxu0 %v319
    %487 = vmatmul.bf16.gmra.mxu0 %v74
    %v488 = vpop.f32.mrf.mxu0
    %v489 = vadd.f32 0.0, %v488
    %v490 = vpop.f32.mrf.mxu0
    %491 = vdwg.mxu0
    %492 = vmatpush.bf16.msra.mxu0 %v369
    %493 = vmatpush.bf16.msra.mxu0 %v362
    %494 = vmatpush.bf16.msra.mxu0 %v355
    %495 = vmatpush.bf16.msra.mxu0 %v348
    %496 = vmatpush.bf16.msra.mxu0 %v341
    %497 = vmatpush.bf16.msra.mxu0 %v334
    %498 = vmatpush.bf16.msra.mxu0 %v327
    %499 = vmatpush.bf16.msra.mxu0 %v320
    %500 = vmatmul.bf16.gmra.mxu0 %v74
    %v501 = vpop.f32.mrf.mxu0
    %v502 = vadd.f32 0.0, %v501
    %v503 = vpop.f32.mrf.mxu0
    %504 = vdwg.mxu0
    %505 = vmatpush.bf16.msra.mxu0 %v370
    %506 = vmatpush.bf16.msra.mxu0 %v363
    %507 = vmatpush.bf16.msra.mxu0 %v356
    %508 = vmatpush.bf16.msra.mxu0 %v349
    %509 = vmatpush.bf16.msra.mxu0 %v342
    %510 = vmatpush.bf16.msra.mxu0 %v335
    %511 = vmatpush.bf16.msra.mxu0 %v328
    %512 = vmatpush.bf16.msra.mxu0 %v321
    %513 = vmatmul.bf16.gmra.mxu0 %v74
    %v514 = vpop.f32.mrf.mxu0
    %v515 = vadd.f32 0.0, %v514
    %v516 = vpop.f32.mrf.mxu0
    %517 = vdwg.mxu0
    %s518 = scalar_lea.vmem [#allocation2], 448
    %v519 = vld [vmem:[%s518] sm:$0xff]
    %v520 = vld [vmem:[%s518 + $0x8] sm:$0xff]
    %v521 = vld [vmem:[%s518 + $0x10] sm:$0xff]
    %v522 = vld [vmem:[%s518 + $0x18] sm:$0xf]
    %v523 = vld [vmem:[%s518 + $0x1c] sm:$0xff]
    %v524 = vld [vmem:[%s518 + $0x24] sm:$0xff]
    %v525 = vld [vmem:[%s518 + $0x2c] sm:$0xff]
    %v526 = vld [vmem:[%s518 + $0x34] sm:$0xf]
    %v527 = vld [vmem:[%s518 + $0x38] sm:$0xff]
    %v528 = vld [vmem:[%s518 + $0x40] sm:$0xff]
    %v529 = vld [vmem:[%s518 + $0x48] sm:$0xff]
    %v530 = vld [vmem:[%s518 + $0x50] sm:$0xf]
    %v531 = vld [vmem:[%s518 + $0x54] sm:$0xff]
    %v532 = vld [vmem:[%s518 + $0x5c] sm:$0xff]
    %v533 = vld [vmem:[%s518 + $0x64] sm:$0xff]
    %v534 = vld [vmem:[%s518 + $0x6c] sm:$0xf]
    %v535 = vld [vmem:[%s518 + $0x70] sm:$0xff]
    %v536 = vld [vmem:[%s518 + $0x78] sm:$0xff]
    %v537 = vld [vmem:[%s518 + $0x80] sm:$0xff]
    %v538 = vld [vmem:[%s518 + $0x88] sm:$0xf]
    %v539 = vld [vmem:[%s518 + $0x8c] sm:$0xff]
    %v540 = vld [vmem:[%s518 + $0x94] sm:$0xff]
    %v541 = vld [vmem:[%s518 + $0x9c] sm:$0xff]
    %v542 = vld [vmem:[%s518 + $0xa4] sm:$0xf]
    %v543 = vld [vmem:[%s518 + $0xa8] sm:$0xff]
    %v544 = vld [vmem:[%s518 + $0xb0] sm:$0xff]
    %v545 = vld [vmem:[%s518 + $0xb8] sm:$0xff]
    %v546 = vld [vmem:[%s518 + $0xc0] sm:$0xf]
    %v547 = vld [vmem:[%s518 + $0xc4] sm:$0xff]
    %v548 = vld [vmem:[%s518 + $0xcc] sm:$0xff]
    %v549 = vld [vmem:[%s518 + $0xd4] sm:$0xff]
    %v550 = vld [vmem:[%s518 + $0xdc] sm:$0xf]
    %v551 = vld [vmem:[%s518 + $0xe0] sm:$0xff]
    %v552 = vld [vmem:[%s518 + $0xe8] sm:$0xff]
    %v553 = vld [vmem:[%s518 + $0xf0] sm:$0xff]
    %v554 = vld [vmem:[%s518 + $0xf8] sm:$0xf]
    %v555 = vld [vmem:[%s518 + $0xfc] sm:$0xff]
    %v556 = vld [vmem:[%s518 + $0x104] sm:$0xff]
    %v557 = vld [vmem:[%s518 + $0x10c] sm:$0xff]
    %v558 = vld [vmem:[%s518 + $0x114] sm:$0xf]
    %v559 = vld [vmem:[%s518 + $0x118] sm:$0xff]
    %v560 = vld [vmem:[%s518 + $0x120] sm:$0xff]
    %v561 = vld [vmem:[%s518 + $0x128] sm:$0xff]
    %v562 = vld [vmem:[%s518 + $0x130] sm:$0xf]
    %v563 = vld [vmem:[%s518 + $0x134] sm:$0xff]
    %v564 = vld [vmem:[%s518 + $0x13c] sm:$0xff]
    %v565 = vld [vmem:[%s518 + $0x144] sm:$0xff]
    %v566 = vld [vmem:[%s518 + $0x14c] sm:$0xf]
    %v567 = vld [vmem:[%s518 + $0x150] sm:$0xff]
    %v568 = vld [vmem:[%s518 + $0x158] sm:$0xff]
    %v569 = vld [vmem:[%s518 + $0x160] sm:$0xff]
    %v570 = vld [vmem:[%s518 + $0x168] sm:$0xf]
    %v571 = vld [vmem:[%s518 + $0x16c] sm:$0xff]
    %v572 = vld [vmem:[%s518 + $0x174] sm:$0xff]
    %v573 = vld [vmem:[%s518 + $0x17c] sm:$0xff]
    %v574 = vld [vmem:[%s518 + $0x184] sm:$0xf]
    %v575 = vld [vmem:[%s518 + $0x188] sm:$0xff]
    %v576 = vld [vmem:[%s518 + $0x190] sm:$0xff]
    %v577 = vld [vmem:[%s518 + $0x198] sm:$0xff]
    %v578 = vld [vmem:[%s518 + $0x1a0] sm:$0xf]
    %v579 = vld [vmem:[%s518 + $0x1a4] sm:$0xff]
    %v580 = vld [vmem:[%s518 + $0x1ac] sm:$0xff]
    %v581 = vld [vmem:[%s518 + $0x1b4] sm:$0xff]
    %v582 = vld [vmem:[%s518 + $0x1bc] sm:$0xf]
    %v647 = vunpack.c.l.b16 %v519
    %v648 = vunpack.c.h.b16 %v519
    %v649 = vunpack.c.l.b16 %v520
    %v650 = vunpack.c.h.b16 %v520
    %v651 = vunpack.c.l.b16 %v521
    %v652 = vunpack.c.h.b16 %v521
    %v653 = vunpack.c.l.b16 %v522
    %v654 = vunpack.c.l.b16 %v523
    %v655 = vunpack.c.h.b16 %v523
    %v656 = vunpack.c.l.b16 %v524
    %v657 = vunpack.c.h.b16 %v524
    %v658 = vunpack.c.l.b16 %v525
    %v659 = vunpack.c.h.b16 %v525
    %v660 = vunpack.c.l.b16 %v526
    %v661 = vunpack.c.l.b16 %v527
    %v662 = vunpack.c.h.b16 %v527
    %v663 = vunpack.c.l.b16 %v528
    %v664 = vunpack.c.h.b16 %v528
    %v665 = vunpack.c.l.b16 %v529
    %v666 = vunpack.c.h.b16 %v529
    %v667 = vunpack.c.l.b16 %v530
    %v668 = vunpack.c.l.b16 %v531
    %v669 = vunpack.c.h.b16 %v531
    %v670 = vunpack.c.l.b16 %v532
    %v671 = vunpack.c.h.b16 %v532
    %v672 = vunpack.c.l.b16 %v533
    %v673 = vunpack.c.h.b16 %v533
    %v674 = vunpack.c.l.b16 %v534
    %v675 = vunpack.c.l.b16 %v535
    %v676 = vunpack.c.h.b16 %v535
    %v677 = vunpack.c.l.b16 %v536
    %v678 = vunpack.c.h.b16 %v536
    %v679 = vunpack.c.l.b16 %v537
    %v680 = vunpack.c.h.b16 %v537
    %v681 = vunpack.c.l.b16 %v538
    %v682 = vunpack.c.l.b16 %v539
    %v683 = vunpack.c.h.b16 %v539
    %v684 = vunpack.c.l.b16 %v540
    %v685 = vunpack.c.h.b16 %v540
    %v686 = vunpack.c.l.b16 %v541
    %v687 = vunpack.c.h.b16 %v541
    %v688 = vunpack.c.l.b16 %v542
    %v689 = vunpack.c.l.b16 %v543
    %v690 = vunpack.c.h.b16 %v543
    %v691 = vunpack.c.l.b16 %v544
    %v692 = vunpack.c.h.b16 %v544
    %v693 = vunpack.c.l.b16 %v545
    %v694 = vunpack.c.h.b16 %v545
    %v695 = vunpack.c.l.b16 %v546
    %v696 = vunpack.c.l.b16 %v547
    %v697 = vunpack.c.h.b16 %v547
    %v698 = vunpack.c.l.b16 %v548
    %v699 = vunpack.c.h.b16 %v548
    %v700 = vunpack.c.l.b16 %v549
    %v701 = vunpack.c.h.b16 %v549
    %v702 = vunpack.c.l.b16 %v550
    %v703 = vunpack.c.l.b16 %v551
    %v704 = vunpack.c.h.b16 %v551
    %v705 = vunpack.c.l.b16 %v552
    %v706 = vunpack.c.h.b16 %v552
    %v707 = vunpack.c.l.b16 %v553
    %v708 = vunpack.c.h.b16 %v553
    %v709 = vunpack.c.l.b16 %v554
    %v710 = vunpack.c.l.b16 %v555
    %v711 = vunpack.c.h.b16 %v555
    %v712 = vunpack.c.l.b16 %v556
    %v713 = vunpack.c.h.b16 %v556
    %v714 = vunpack.c.l.b16 %v557
    %v715 = vunpack.c.h.b16 %v557
    %v716 = vunpack.c.l.b16 %v558
    %v717 = vunpack.c.l.b16 %v559
    %v718 = vunpack.c.h.b16 %v559
    %v719 = vunpack.c.l.b16 %v560
    %v720 = vunpack.c.h.b16 %v560
    %v721 = vunpack.c.l.b16 %v561
    %v722 = vunpack.c.h.b16 %v561
    %v723 = vunpack.c.l.b16 %v562
    %v724 = vunpack.c.l.b16 %v563
    %v725 = vunpack.c.h.b16 %v563
    %v726 = vunpack.c.l.b16 %v564
    %v727 = vunpack.c.h.b16 %v564
    %v728 = vunpack.c.l.b16 %v565
    %v729 = vunpack.c.h.b16 %v565
    %v730 = vunpack.c.l.b16 %v566
    %v731 = vunpack.c.l.b16 %v567
    %v732 = vunpack.c.h.b16 %v567
    %v733 = vunpack.c.l.b16 %v568
    %v734 = vunpack.c.h.b16 %v568
    %v735 = vunpack.c.l.b16 %v569
    %v736 = vunpack.c.h.b16 %v569
    %v737 = vunpack.c.l.b16 %v570
    %v738 = vunpack.c.l.b16 %v571
    %v739 = vunpack.c.h.b16 %v571
    %v740 = vunpack.c.l.b16 %v572
    %v741 = vunpack.c.h.b16 %v572
    %v742 = vunpack.c.l.b16 %v573
    %v743 = vunpack.c.h.b16 %v573
    %v744 = vunpack.c.l.b16 %v574
    %v745 = vunpack.c.l.b16 %v575
    %v746 = vunpack.c.h.b16 %v575
    %v747 = vunpack.c.l.b16 %v576
    %v748 = vunpack.c.h.b16 %v576
    %v749 = vunpack.c.l.b16 %v577
    %v750 = vunpack.c.h.b16 %v577
    %v751 = vunpack.c.l.b16 %v578
    %v752 = vunpack.c.l.b16 %v579
    %v753 = vunpack.c.h.b16 %v579
    %v754 = vunpack.c.l.b16 %v580
    %v755 = vunpack.c.h.b16 %v580
    %v756 = vunpack.c.l.b16 %v581
    %v757 = vunpack.c.h.b16 %v581
    %v758 = vunpack.c.l.b16 %v582
    %v759 = vpack.c.b16 %v654, %v647
    %v760 = vpack.c.b16 %v655, %v648
    %v761 = vpack.c.b16 %v656, %v649
    %v762 = vpack.c.b16 %v657, %v650
    %v763 = vpack.c.b16 %v658, %v651
    %v764 = vpack.c.b16 %v659, %v652
    %v765 = vpack.c.b16 %v660, %v653
    %v766 = vpack.c.b16 %v668, %v661
    %v767 = vpack.c.b16 %v669, %v662
    %v768 = vpack.c.b16 %v670, %v663
    %v769 = vpack.c.b16 %v671, %v664
    %v770 = vpack.c.b16 %v672, %v665
    %v771 = vpack.c.b16 %v673, %v666
    %v772 = vpack.c.b16 %v674, %v667
    %v773 = vpack.c.b16 %v682, %v675
    %v774 = vpack.c.b16 %v683, %v676
    %v775 = vpack.c.b16 %v684, %v677
    %v776 = vpack.c.b16 %v685, %v678
    %v777 = vpack.c.b16 %v686, %v679
    %v778 = vpack.c.b16 %v687, %v680
    %v779 = vpack.c.b16 %v688, %v681
    %v780 = vpack.c.b16 %v696, %v689
    %v781 = vpack.c.b16 %v697, %v690
    %v782 = vpack.c.b16 %v698, %v691
    %v783 = vpack.c.b16 %v699, %v692
    %v784 = vpack.c.b16 %v700, %v693
    %v785 = vpack.c.b16 %v701, %v694
    %v786 = vpack.c.b16 %v702, %v695
    %v787 = vpack.c.b16 %v710, %v703
    %v788 = vpack.c.b16 %v711, %v704
    %v789 = vpack.c.b16 %v712, %v705
    %v790 = vpack.c.b16 %v713, %v706
    %v791 = vpack.c.b16 %v714, %v707
    %v792 = vpack.c.b16 %v715, %v708
    %v793 = vpack.c.b16 %v716, %v709
    %v794 = vpack.c.b16 %v724, %v717
    %v795 = vpack.c.b16 %v725, %v718
    %v796 = vpack.c.b16 %v726, %v719
    %v797 = vpack.c.b16 %v727, %v720
    %v798 = vpack.c.b16 %v728, %v721
    %v799 = vpack.c.b16 %v729, %v722
    %v800 = vpack.c.b16 %v730, %v723
    %v801 = vpack.c.b16 %v738, %v731
    %v802 = vpack.c.b16 %v739, %v732
    %v803 = vpack.c.b16 %v740, %v733
    %v804 = vpack.c.b16 %v741, %v734
    %v805 = vpack.c.b16 %v742, %v735
    %v806 = vpack.c.b16 %v743, %v736
    %v807 = vpack.c.b16 %v744, %v737
    %v808 = vpack.c.b16 %v752, %v745
    %v809 = vpack.c.b16 %v753, %v746
    %v810 = vpack.c.b16 %v754, %v747
    %v811 = vpack.c.b16 %v755, %v748
    %v812 = vpack.c.b16 %v756, %v749
    %v813 = vpack.c.b16 %v757, %v750
    %v814 = vpack.c.b16 %v758, %v751
    %871 = vmatpush.bf16.msra.mxu0 %v808
    %872 = vmatpush.bf16.msra.mxu0 %v801
    %873 = vmatpush.bf16.msra.mxu0 %v794
    %874 = vmatpush.bf16.msra.mxu0 %v787
    %875 = vmatpush.bf16.msra.mxu0 %v780
    %876 = vmatpush.bf16.msra.mxu0 %v773
    %877 = vmatpush.bf16.msra.mxu0 %v766
    %878 = vmatpush.bf16.msra.mxu0 %v759
    %879 = vmatmul.bf16.gmra.mxu0 %v74
    %v880 = vpop.f32.mrf.mxu0
    %v881 = vadd.f32 0.0, %v880
    %v882 = vpop.f32.mrf.mxu0
    %883 = vdwg.mxu0
    %884 = vmatpush.bf16.msra.mxu0 %v809
    %885 = vmatpush.bf16.msra.mxu0 %v802
    %886 = vmatpush.bf16.msra.mxu0 %v795
    %887 = vmatpush.bf16.msra.mxu0 %v788
    %888 = vmatpush.bf16.msra.mxu0 %v781
    %889 = vmatpush.bf16.msra.mxu0 %v774
    %890 = vmatpush.bf16.msra.mxu0 %v767
    %891 = vmatpush.bf16.msra.mxu0 %v760
    %892 = vmatmul.bf16.gmra.mxu0 %v74
    %v893 = vpop.f32.mrf.mxu0
    %v894 = vadd.f32 0.0, %v893
    %v895 = vpop.f32.mrf.mxu0
    %896 = vdwg.mxu0
    %897 = vmatpush.bf16.msra.mxu0 %v810
    %898 = vmatpush.bf16.msra.mxu0 %v803
    %899 = vmatpush.bf16.msra.mxu0 %v796
    %900 = vmatpush.bf16.msra.mxu0 %v789
    %901 = vmatpush.bf16.msra.mxu0 %v782
    %902 = vmatpush.bf16.msra.mxu0 %v775
    %903 = vmatpush.bf16.msra.mxu0 %v768
    %904 = vmatpush.bf16.msra.mxu0 %v761
    %905 = vmatmul.bf16.gmra.mxu0 %v74
    %v906 = vpop.f32.mrf.mxu0
    %v907 = vadd.f32 0.0, %v906
    %v908 = vpop.f32.mrf.mxu0
    %909 = vdwg.mxu0
    %910 = vmatpush.bf16.msra.mxu0 %v811
    %911 = vmatpush.bf16.msra.mxu0 %v804
    %912 = vmatpush.bf16.msra.mxu0 %v797
    %913 = vmatpush.bf16.msra.mxu0 %v790
    %914 = vmatpush.bf16.msra.mxu0 %v783
    %915 = vmatpush.bf16.msra.mxu0 %v776
    %916 = vmatpush.bf16.msra.mxu0 %v769
    %917 = vmatpush.bf16.msra.mxu0 %v762
    %918 = vmatmul.bf16.gmra.mxu0 %v74
    %v919 = vpop.f32.mrf.mxu0
    %v920 = vadd.f32 0.0, %v919
    %v921 = vpop.f32.mrf.mxu0
    %922 = vdwg.mxu0
    %923 = vmatpush.bf16.msra.mxu0 %v812
    %924 = vmatpush.bf16.msra.mxu0 %v805
    %925 = vmatpush.bf16.msra.mxu0 %v798
    %926 = vmatpush.bf16.msra.mxu0 %v791
    %927 = vmatpush.bf16.msra.mxu0 %v784
    %928 = vmatpush.bf16.msra.mxu0 %v777
    %929 = vmatpush.bf16.msra.mxu0 %v770
    %930 = vmatpush.bf16.msra.mxu0 %v763
    %931 = vmatmul.bf16.gmra.mxu0 %v74
    %v932 = vpop.f32.mrf.mxu0
    %v933 = vadd.f32 0.0, %v932
    %v934 = vpop.f32.mrf.mxu0
    %935 = vdwg.mxu0
    %936 = vmatpush.bf16.msra.mxu0 %v813
    %937 = vmatpush.bf16.msra.mxu0 %v806
    %938 = vmatpush.bf16.msra.mxu0 %v799
    %939 = vmatpush.bf16.msra.mxu0 %v792
    %940 = vmatpush.bf16.msra.mxu0 %v785
    %941 = vmatpush.bf16.msra.mxu0 %v778
    %942 = vmatpush.bf16.msra.mxu0 %v771
    %943 = vmatpush.bf16.msra.mxu0 %v764
    %944 = vmatmul.bf16.gmra.mxu0 %v74
    %v945 = vpop.f32.mrf.mxu0
    %v946 = vadd.f32 0.0, %v945
    %v947 = vpop.f32.mrf.mxu0
    %948 = vdwg.mxu0
    %949 = vmatpush.bf16.msra.mxu0 %v814
    %950 = vmatpush.bf16.msra.mxu0 %v807
    %951 = vmatpush.bf16.msra.mxu0 %v800
    %952 = vmatpush.bf16.msra.mxu0 %v793
    %953 = vmatpush.bf16.msra.mxu0 %v786
    %954 = vmatpush.bf16.msra.mxu0 %v779
    %955 = vmatpush.bf16.msra.mxu0 %v772
    %956 = vmatpush.bf16.msra.mxu0 %v765
    %957 = vmatmul.bf16.gmra.mxu0 %v74
    %v958 = vpop.f32.mrf.mxu0
    %v959 = vadd.f32 0.0, %v958
    %v960 = vpop.f32.mrf.mxu0
    %961 = vdwg.mxu0
    %v962 = vmax.f32 %v437, %v881
    %v963 = vmax.f32 %v450, %v894
    %v964 = vmax.f32 %v463, %v907
    %v965 = vmax.f32 %v476, %v920
    %v966 = vmax.f32 %v489, %v933
    %v967 = vmax.f32 %v502, %v946
    %v968 = vmax.f32 %v515, %v959
    %v969 = vld [vmem:[%s2] sm:$0xff]
    %v971 = vperm.slane %v969, 0
    %v972 = vperm.slane %v969, 1
    %v973 = vperm.slane %v969, 2
    %v974 = vperm.slane %v969, 3
    %v975 = vperm.slane %v969, 4
    %v976 = vperm.slane %v969, 5
    %v977 = vperm.slane %v969, 6
    %v985 = vadd.f32 %v962, %v971
    %v986 = vadd.f32 %v963, %v972
    %v987 = vadd.f32 %v964, %v973
    %v988 = vadd.f32 %v965, %v974
    %v989 = vadd.f32 %v966, %v975
    %v990 = vadd.f32 %v967, %v976
    %v991 = vadd.f32 %v968, %v977
    %v992 = vtanh.pop %v985
    %v993 = vtanh.pop %v986
    %v994 = vtanh.pop %v987
    %v995 = vtanh.pop %v988
    %v996 = vtanh.pop %v989
    %v997 = vtanh.pop %v990
    %v998 = vtanh.pop %v991
    %v999 = vpack.c.bf16 %v992, %v992
    %v1000 = vpack.c.bf16 %v993, %v993
    %v1001 = vpack.c.bf16 %v994, %v994
    %v1002 = vpack.c.bf16 %v995, %v995
    %v1003 = vpack.c.bf16 %v996, %v996
    %v1004 = vpack.c.bf16 %v997, %v997
    %v1005 = vpack.c.bf16 %v998, %v998
    %v1006 = vld [vmem:[#allocation5] sm:$0xf]
    %v1007 = vld [vmem:[#allocation5 + $0x4] sm:$0xf]
    %v1008 = vld [vmem:[#allocation5 + $0x8] sm:$0xf]
    %v1009 = vld [vmem:[#allocation5 + $0xc] sm:$0xf]
    %v1010 = vld [vmem:[#allocation5 + $0x10] sm:$0xf]
    %v1011 = vld [vmem:[#allocation5 + $0x14] sm:$0xf]
    %v1012 = vld [vmem:[#allocation5 + $0x18] sm:$0xf]
    %v1013 = vld [vmem:[#allocation5 + $0x1c] sm:$0xf]
    %v1014 = vld [vmem:[#allocation5 + $0x20] sm:$0xf]
    %v1015 = vld [vmem:[#allocation5 + $0x24] sm:$0xf]
    %v1016 = vld [vmem:[#allocation5 + $0x28] sm:$0xf]
    %v1017 = vld [vmem:[#allocation5 + $0x2c] sm:$0xf]
    %v1018 = vld [vmem:[#allocation5 + $0x30] sm:$0xf]
    %v1019 = vld [vmem:[#allocation5 + $0x34] sm:$0xf]
    %v1020 = vld [vmem:[#allocation5 + $0x38] sm:$0xf]
    %v1021 = vld [vmem:[#allocation5 + $0x3c] sm:$0xf]
    %v1022 = vld [vmem:[#allocation5 + $0x40] sm:$0xf]
    %v1023 = vld [vmem:[#allocation5 + $0x44] sm:$0xf]
    %v1024 = vld [vmem:[#allocation5 + $0x48] sm:$0xf]
    %v1025 = vld [vmem:[#allocation5 + $0x4c] sm:$0xf]
    %v1026 = vld [vmem:[#allocation5 + $0x50] sm:$0xf]
    %v1027 = vld [vmem:[#allocation5 + $0x54] sm:$0xf]
    %v1028 = vld [vmem:[#allocation5 + $0x58] sm:$0xf]
    %v1029 = vld [vmem:[#allocation5 + $0x5c] sm:$0xf]
    %v1030 = vld [vmem:[#allocation5 + $0x60] sm:$0xf]
    %v1031 = vld [vmem:[#allocation5 + $0x64] sm:$0xf]
    %v1032 = vld [vmem:[#allocation5 + $0x68] sm:$0xf]
    %v1033 = vld [vmem:[#allocation5 + $0x6c] sm:$0xf]
    %v1034 = vld [vmem:[#allocation5 + $0x70] sm:$0xf]
    %v1035 = vld [vmem:[#allocation5 + $0x74] sm:$0xf]
    %v1036 = vld [vmem:[#allocation5 + $0x78] sm:$0xf]
    %v1037 = vld [vmem:[#allocation5 + $0x7c] sm:$0xf]
    %v1038 = vld [vmem:[#allocation5 + $0x80] sm:$0xf]
    %v1039 = vld [vmem:[#allocation5 + $0x84] sm:$0xf]
    %v1040 = vld [vmem:[#allocation5 + $0x88] sm:$0xf]
    %v1041 = vld [vmem:[#allocation5 + $0x8c] sm:$0xf]
    %v1042 = vld [vmem:[#allocation5 + $0x90] sm:$0xf]
    %v1043 = vld [vmem:[#allocation5 + $0x94] sm:$0xf]
    %v1044 = vld [vmem:[#allocation5 + $0x98] sm:$0xf]
    %v1045 = vld [vmem:[#allocation5 + $0x9c] sm:$0xf]
    %v1046 = vld [vmem:[#allocation5 + $0xa0] sm:$0xf]
    %v1047 = vld [vmem:[#allocation5 + $0xa4] sm:$0xf]
    %v1048 = vld [vmem:[#allocation5 + $0xa8] sm:$0xf]
    %v1049 = vld [vmem:[#allocation5 + $0xac] sm:$0xf]
    %v1050 = vld [vmem:[#allocation5 + $0xb0] sm:$0xf]
    %v1051 = vld [vmem:[#allocation5 + $0xb4] sm:$0xf]
    %v1052 = vld [vmem:[#allocation5 + $0xb8] sm:$0xf]
    %v1053 = vld [vmem:[#allocation5 + $0xbc] sm:$0xf]
    %v1054 = vld [vmem:[#allocation5 + $0xc0] sm:$0xf]
    %v1055 = vld [vmem:[#allocation5 + $0xc4] sm:$0xf]
    %v1056 = vld [vmem:[#allocation5 + $0xc8] sm:$0xf]
    %v1057 = vld [vmem:[#allocation5 + $0xcc] sm:$0xf]
    %v1058 = vld [vmem:[#allocation5 + $0xd0] sm:$0xf]
    %v1059 = vld [vmem:[#allocation5 + $0xd4] sm:$0xf]
    %v1060 = vld [vmem:[#allocation5 + $0xd8] sm:$0xf]
    %v1061 = vld [vmem:[#allocation5 + $0xdc] sm:$0xf]
    %v1062 = vld [vmem:[#allocation5 + $0xe0] sm:$0xf]
    %v1063 = vld [vmem:[#allocation5 + $0xe4] sm:$0xf]
    %v1064 = vld [vmem:[#allocation5 + $0xe8] sm:$0xf]
    %v1065 = vld [vmem:[#allocation5 + $0xec] sm:$0xf]
    %v1066 = vld [vmem:[#allocation5 + $0xf0] sm:$0xf]
    %v1067 = vld [vmem:[#allocation5 + $0xf4] sm:$0xf]
    %v1068 = vld [vmem:[#allocation5 + $0xf8] sm:$0xf]
    %v1069 = vld [vmem:[#allocation5 + $0xfc] sm:$0xf]
    %v1070 = vld [vmem:[#allocation5 + $0x100] sm:$0xf]
    %v1071 = vld [vmem:[#allocation5 + $0x104] sm:$0xf]
    %v1072 = vld [vmem:[#allocation5 + $0x108] sm:$0xf]
    %v1073 = vld [vmem:[#allocation5 + $0x10c] sm:$0xf]
    %v1074 = vld [vmem:[#allocation5 + $0x110] sm:$0xf]
    %v1075 = vld [vmem:[#allocation5 + $0x114] sm:$0xf]
    %v1076 = vld [vmem:[#allocation5 + $0x118] sm:$0xf]
    %v1077 = vld [vmem:[#allocation5 + $0x11c] sm:$0xf]
    %v1078 = vld [vmem:[#allocation5 + $0x120] sm:$0xf]
    %v1079 = vld [vmem:[#allocation5 + $0x124] sm:$0xf]
    %v1080 = vld [vmem:[#allocation5 + $0x128] sm:$0xf]
    %v1081 = vld [vmem:[#allocation5 + $0x12c] sm:$0xf]
    %v1082 = vld [vmem:[#allocation5 + $0x130] sm:$0xf]
    %v1083 = vld [vmem:[#allocation5 + $0x134] sm:$0xf]
    %v1084 = vld [vmem:[#allocation5 + $0x138] sm:$0xf]
    %v1085 = vld [vmem:[#allocation5 + $0x13c] sm:$0xf]
    %v1086 = vld [vmem:[#allocation5 + $0x140] sm:$0xf]
    %v1087 = vld [vmem:[#allocation5 + $0x144] sm:$0xf]
    %v1088 = vld [vmem:[#allocation5 + $0x148] sm:$0xf]
    %v1089 = vld [vmem:[#allocation5 + $0x14c] sm:$0xf]
    %v1090 = vld [vmem:[#allocation5 + $0x150] sm:$0xf]
    %v1091 = vld [vmem:[#allocation5 + $0x154] sm:$0xf]
    %v1092 = vld [vmem:[#allocation5 + $0x158] sm:$0xf]
    %v1093 = vld [vmem:[#allocation5 + $0x15c] sm:$0xf]
    %v1094 = vld [vmem:[#allocation5 + $0x160] sm:$0xf]
    %v1095 = vld [vmem:[#allocation5 + $0x164] sm:$0xf]
    %v1096 = vld [vmem:[#allocation5 + $0x168] sm:$0xf]
    %v1097 = vld [vmem:[#allocation5 + $0x16c] sm:$0xf]
    %v1098 = vld [vmem:[#allocation5 + $0x170] sm:$0xf]
    %v1099 = vld [vmem:[#allocation5 + $0x174] sm:$0xf]
    %v1100 = vld [vmem:[#allocation5 + $0x178] sm:$0xf]
    %v1101 = vld [vmem:[#allocation5 + $0x17c] sm:$0xf]
    %v1102 = vld [vmem:[#allocation5 + $0x180] sm:$0xf]
    %v1103 = vld [vmem:[#allocation5 + $0x184] sm:$0xf]
    %v1104 = vld [vmem:[#allocation5 + $0x188] sm:$0xf]
    %v1105 = vld [vmem:[#allocation5 + $0x18c] sm:$0xf]
    %v1106 = vld [vmem:[#allocation5 + $0x190] sm:$0xf]
    %v1107 = vld [vmem:[#allocation5 + $0x194] sm:$0xf]
    %v1108 = vld [vmem:[#allocation5 + $0x198] sm:$0xf]
    %v1109 = vld [vmem:[#allocation5 + $0x19c] sm:$0xf]
    %v1110 = vld [vmem:[#allocation5 + $0x1a0] sm:$0xf]
    %v1111 = vld [vmem:[#allocation5 + $0x1a4] sm:$0xf]
    %v1112 = vld [vmem:[#allocation5 + $0x1a8] sm:$0xf]
    %v1113 = vld [vmem:[#allocation5 + $0x1ac] sm:$0xf]
    %v1114 = vld [vmem:[#allocation5 + $0x1b0] sm:$0xf]
    %v1115 = vld [vmem:[#allocation5 + $0x1b4] sm:$0xf]
    %v1116 = vld [vmem:[#allocation5 + $0x1b8] sm:$0xf]
    %v1117 = vld [vmem:[#allocation5 + $0x1bc] sm:$0xf]
    %v1118 = vld [vmem:[%s4] sm:$0x1]
    %v1120 = vperm.slane %v1118, 0
    %v1234 = vunpack.c.l.b16 %v1006
    %v1235 = vunpack.c.l.b16 %v1007
    %v1236 = vunpack.c.l.b16 %v1008
    %v1237 = vunpack.c.l.b16 %v1009
    %v1238 = vunpack.c.l.b16 %v1010
    %v1239 = vunpack.c.l.b16 %v1011
    %v1240 = vunpack.c.l.b16 %v1012
    %v1241 = vunpack.c.l.b16 %v1013
    %v1242 = vunpack.c.l.b16 %v1014
    %v1243 = vunpack.c.l.b16 %v1015
    %v1244 = vunpack.c.l.b16 %v1016
    %v1245 = vunpack.c.l.b16 %v1017
    %v1246 = vunpack.c.l.b16 %v1018
    %v1247 = vunpack.c.l.b16 %v1019
    %v1248 = vunpack.c.l.b16 %v1020
    %v1249 = vunpack.c.l.b16 %v1021
    %v1250 = vunpack.c.l.b16 %v1022
    %v1251 = vunpack.c.l.b16 %v1023
    %v1252 = vunpack.c.l.b16 %v1024
    %v1253 = vunpack.c.l.b16 %v1025
    %v1254 = vunpack.c.l.b16 %v1026
    %v1255 = vunpack.c.l.b16 %v1027
    %v1256 = vunpack.c.l.b16 %v1028
    %v1257 = vunpack.c.l.b16 %v1029
    %v1258 = vunpack.c.l.b16 %v1030
    %v1259 = vunpack.c.l.b16 %v1031
    %v1260 = vunpack.c.l.b16 %v1032
    %v1261 = vunpack.c.l.b16 %v1033
    %v1262 = vunpack.c.l.b16 %v1034
    %v1263 = vunpack.c.l.b16 %v1035
    %v1264 = vunpack.c.l.b16 %v1036
    %v1265 = vunpack.c.l.b16 %v1037
    %v1266 = vunpack.c.l.b16 %v1038
    %v1267 = vunpack.c.l.b16 %v1039
    %v1268 = vunpack.c.l.b16 %v1040
    %v1269 = vunpack.c.l.b16 %v1041
    %v1270 = vunpack.c.l.b16 %v1042
    %v1271 = vunpack.c.l.b16 %v1043
    %v1272 = vunpack.c.l.b16 %v1044
    %v1273 = vunpack.c.l.b16 %v1045
    %v1274 = vunpack.c.l.b16 %v1046
    %v1275 = vunpack.c.l.b16 %v1047
    %v1276 = vunpack.c.l.b16 %v1048
    %v1277 = vunpack.c.l.b16 %v1049
    %v1278 = vunpack.c.l.b16 %v1050
    %v1279 = vunpack.c.l.b16 %v1051
    %v1280 = vunpack.c.l.b16 %v1052
    %v1281 = vunpack.c.l.b16 %v1053
    %v1282 = vunpack.c.l.b16 %v1054
    %v1283 = vunpack.c.l.b16 %v1055
    %v1284 = vunpack.c.l.b16 %v1056
    %v1285 = vunpack.c.l.b16 %v1057
    %v1286 = vunpack.c.l.b16 %v1058
    %v1287 = vunpack.c.l.b16 %v1059
    %v1288 = vunpack.c.l.b16 %v1060
    %v1289 = vunpack.c.l.b16 %v1061
    %v1290 = vunpack.c.l.b16 %v1062
    %v1291 = vunpack.c.l.b16 %v1063
    %v1292 = vunpack.c.l.b16 %v1064
    %v1293 = vunpack.c.l.b16 %v1065
    %v1294 = vunpack.c.l.b16 %v1066
    %v1295 = vunpack.c.l.b16 %v1067
    %v1296 = vunpack.c.l.b16 %v1068
    %v1297 = vunpack.c.l.b16 %v1069
    %v1298 = vunpack.c.l.b16 %v1070
    %v1299 = vunpack.c.l.b16 %v1071
    %v1300 = vunpack.c.l.b16 %v1072
    %v1301 = vunpack.c.l.b16 %v1073
    %v1302 = vunpack.c.l.b16 %v1074
    %v1303 = vunpack.c.l.b16 %v1075
    %v1304 = vunpack.c.l.b16 %v1076
    %v1305 = vunpack.c.l.b16 %v1077
    %v1306 = vunpack.c.l.b16 %v1078
    %v1307 = vunpack.c.l.b16 %v1079
    %v1308 = vunpack.c.l.b16 %v1080
    %v1309 = vunpack.c.l.b16 %v1081
    %v1310 = vunpack.c.l.b16 %v1082
    %v1311 = vunpack.c.l.b16 %v1083
    %v1312 = vunpack.c.l.b16 %v1084
    %v1313 = vunpack.c.l.b16 %v1085
    %v1314 = vunpack.c.l.b16 %v1086
    %v1315 = vunpack.c.l.b16 %v1087
    %v1316 = vunpack.c.l.b16 %v1088
    %v1317 = vunpack.c.l.b16 %v1089
    %v1318 = vunpack.c.l.b16 %v1090
    %v1319 = vunpack.c.l.b16 %v1091
    %v1320 = vunpack.c.l.b16 %v1092
    %v1321 = vunpack.c.l.b16 %v1093
    %v1322 = vunpack.c.l.b16 %v1094
    %v1323 = vunpack.c.l.b16 %v1095
    %v1324 = vunpack.c.l.b16 %v1096
    %v1325 = vunpack.c.l.b16 %v1097
    %v1326 = vunpack.c.l.b16 %v1098
    %v1327 = vunpack.c.l.b16 %v1099
    %v1328 = vunpack.c.l.b16 %v1100
    %v1329 = vunpack.c.l.b16 %v1101
    %v1330 = vunpack.c.l.b16 %v1102
    %v1331 = vunpack.c.l.b16 %v1103
    %v1332 = vunpack.c.l.b16 %v1104
    %v1333 = vunpack.c.l.b16 %v1105
    %v1334 = vunpack.c.l.b16 %v1106
    %v1335 = vunpack.c.l.b16 %v1107
    %v1336 = vunpack.c.l.b16 %v1108
    %v1337 = vunpack.c.l.b16 %v1109
    %v1338 = vunpack.c.l.b16 %v1110
    %v1339 = vunpack.c.l.b16 %v1111
    %v1340 = vunpack.c.l.b16 %v1112
    %v1341 = vunpack.c.l.b16 %v1113
    %v1342 = vunpack.c.l.b16 %v1114
    %v1343 = vunpack.c.l.b16 %v1115
    %v1344 = vunpack.c.l.b16 %v1116
    %v1345 = vunpack.c.l.b16 %v1117
    %v1346 = vpack.c.b16 %v1235, %v1234
    %v1347 = vpack.c.b16 %v1237, %v1236
    %v1348 = vpack.c.b16 %v1239, %v1238
    %v1349 = vpack.c.b16 %v1241, %v1240
    %v1350 = vpack.c.b16 %v1243, %v1242
    %v1351 = vpack.c.b16 %v1245, %v1244
    %v1352 = vpack.c.b16 %v1247, %v1246
    %v1353 = vpack.c.b16 %v1249, %v1248
    %v1354 = vpack.c.b16 %v1251, %v1250
    %v1355 = vpack.c.b16 %v1253, %v1252
    %v1356 = vpack.c.b16 %v1255, %v1254
    %v1357 = vpack.c.b16 %v1257, %v1256
    %v1358 = vpack.c.b16 %v1259, %v1258
    %v1359 = vpack.c.b16 %v1261, %v1260
    %v1360 = vpack.c.b16 %v1263, %v1262
    %v1361 = vpack.c.b16 %v1265, %v1264
    %v1362 = vpack.c.b16 %v1267, %v1266
    %v1363 = vpack.c.b16 %v1269, %v1268
    %v1364 = vpack.c.b16 %v1271, %v1270
    %v1365 = vpack.c.b16 %v1273, %v1272
    %v1366 = vpack.c.b16 %v1275, %v1274
    %v1367 = vpack.c.b16 %v1277, %v1276
    %v1368 = vpack.c.b16 %v1279, %v1278
    %v1369 = vpack.c.b16 %v1281, %v1280
    %v1370 = vpack.c.b16 %v1283, %v1282
    %v1371 = vpack.c.b16 %v1285, %v1284
    %v1372 = vpack.c.b16 %v1287, %v1286
    %v1373 = vpack.c.b16 %v1289, %v1288
    %v1374 = vpack.c.b16 %v1291, %v1290
    %v1375 = vpack.c.b16 %v1293, %v1292
    %v1376 = vpack.c.b16 %v1295, %v1294
    %v1377 = vpack.c.b16 %v1297, %v1296
    %v1378 = vpack.c.b16 %v1299, %v1298
    %v1379 = vpack.c.b16 %v1301, %v1300
    %v1380 = vpack.c.b16 %v1303, %v1302
    %v1381 = vpack.c.b16 %v1305, %v1304
    %v1382 = vpack.c.b16 %v1307, %v1306
    %v1383 = vpack.c.b16 %v1309, %v1308
    %v1384 = vpack.c.b16 %v1311, %v1310
    %v1385 = vpack.c.b16 %v1313, %v1312
    %v1386 = vpack.c.b16 %v1315, %v1314
    %v1387 = vpack.c.b16 %v1317, %v1316
    %v1388 = vpack.c.b16 %v1319, %v1318
    %v1389 = vpack.c.b16 %v1321, %v1320
    %v1390 = vpack.c.b16 %v1323, %v1322
    %v1391 = vpack.c.b16 %v1325, %v1324
    %v1392 = vpack.c.b16 %v1327, %v1326
    %v1393 = vpack.c.b16 %v1329, %v1328
    %v1394 = vpack.c.b16 %v1331, %v1330
    %v1395 = vpack.c.b16 %v1333, %v1332
    %v1396 = vpack.c.b16 %v1335, %v1334
    %v1397 = vpack.c.b16 %v1337, %v1336
    %v1398 = vpack.c.b16 %v1339, %v1338
    %v1399 = vpack.c.b16 %v1341, %v1340
    %v1400 = vpack.c.b16 %v1343, %v1342
    %v1401 = vpack.c.b16 %v1345, %v1344
    %1458 = vmatpush.bf16.msra.mxu0 %v1353
    %1459 = vmatpush.bf16.msra.mxu0 %v1352
    %1460 = vmatpush.bf16.msra.mxu0 %v1351
    %1461 = vmatpush.bf16.msra.mxu0 %v1350
    %1462 = vmatpush.bf16.msra.mxu0 %v1349
    %1463 = vmatpush.bf16.msra.mxu0 %v1348
    %1464 = vmatpush.bf16.msra.mxu0 %v1347
    %1465 = vmatpush.bf16.msra.mxu0 %v1346
    %1466 = vmatmul.bf16.gmra.mxu0 %v999
    %v1467 = vpop.f32.mrf.mxu0
    %v1468 = vadd.f32 %v1120, %v1467
    %v1469 = vpop.f32.mrf.mxu0
    %1470 = vdwg.mxu0
    %1471 = vmatpush.bf16.msra.mxu0 %v1361
    %1472 = vmatpush.bf16.msra.mxu0 %v1360
    %1473 = vmatpush.bf16.msra.mxu0 %v1359
    %1474 = vmatpush.bf16.msra.mxu0 %v1358
    %1475 = vmatpush.bf16.msra.mxu0 %v1357
    %1476 = vmatpush.bf16.msra.mxu0 %v1356
    %1477 = vmatpush.bf16.msra.mxu0 %v1355
    %1478 = vmatpush.bf16.msra.mxu0 %v1354
    %1479 = vmatmul.bf16.gmra.mxu0 %v1000
    %v1480 = vpop.f32.mrf.mxu0
    %v1481 = vadd.f32 %v1468, %v1480
    %v1482 = vpop.f32.mrf.mxu0
    %1483 = vdwg.mxu0
    %1484 = vmatpush.bf16.msra.mxu0 %v1369
    %1485 = vmatpush.bf16.msra.mxu0 %v1368
    %1486 = vmatpush.bf16.msra.mxu0 %v1367
    %1487 = vmatpush.bf16.msra.mxu0 %v1366
    %1488 = vmatpush.bf16.msra.mxu0 %v1365
    %1489 = vmatpush.bf16.msra.mxu0 %v1364
    %1490 = vmatpush.bf16.msra.mxu0 %v1363
    %1491 = vmatpush.bf16.msra.mxu0 %v1362
    %1492 = vmatmul.bf16.gmra.mxu0 %v1001
    %v1493 = vpop.f32.mrf.mxu0
    %v1494 = vadd.f32 %v1481, %v1493
    %v1495 = vpop.f32.mrf.mxu0
    %1496 = vdwg.mxu0
    %1497 = vmatpush.bf16.msra.mxu0 %v1377
    %1498 = vmatpush.bf16.msra.mxu0 %v1376
    %1499 = vmatpush.bf16.msra.mxu0 %v1375
    %1500 = vmatpush.bf16.msra.mxu0 %v1374
    %1501 = vmatpush.bf16.msra.mxu0 %v1373
    %1502 = vmatpush.bf16.msra.mxu0 %v1372
    %1503 = vmatpush.bf16.msra.mxu0 %v1371
    %1504 = vmatpush.bf16.msra.mxu0 %v1370
    %1505 = vmatmul.bf16.gmra.mxu0 %v1002
    %v1506 = vpop.f32.mrf.mxu0
    %v1507 = vadd.f32 %v1494, %v1506
    %v1508 = vpop.f32.mrf.mxu0
    %1509 = vdwg.mxu0
    %1510 = vmatpush.bf16.msra.mxu0 %v1385
    %1511 = vmatpush.bf16.msra.mxu0 %v1384
    %1512 = vmatpush.bf16.msra.mxu0 %v1383
    %1513 = vmatpush.bf16.msra.mxu0 %v1382
    %1514 = vmatpush.bf16.msra.mxu0 %v1381
    %1515 = vmatpush.bf16.msra.mxu0 %v1380
    %1516 = vmatpush.bf16.msra.mxu0 %v1379
    %1517 = vmatpush.bf16.msra.mxu0 %v1378
    %1518 = vmatmul.bf16.gmra.mxu0 %v1003
    %v1519 = vpop.f32.mrf.mxu0
    %v1520 = vadd.f32 %v1507, %v1519
    %v1521 = vpop.f32.mrf.mxu0
    %1522 = vdwg.mxu0
    %1523 = vmatpush.bf16.msra.mxu0 %v1393
    %1524 = vmatpush.bf16.msra.mxu0 %v1392
    %1525 = vmatpush.bf16.msra.mxu0 %v1391
    %1526 = vmatpush.bf16.msra.mxu0 %v1390
    %1527 = vmatpush.bf16.msra.mxu0 %v1389
    %1528 = vmatpush.bf16.msra.mxu0 %v1388
    %1529 = vmatpush.bf16.msra.mxu0 %v1387
    %1530 = vmatpush.bf16.msra.mxu0 %v1386
    %1531 = vmatmul.bf16.gmra.mxu0 %v1004
    %v1532 = vpop.f32.mrf.mxu0
    %v1533 = vadd.f32 %v1520, %v1532
    %v1534 = vpop.f32.mrf.mxu0
    %1535 = vdwg.mxu0
    %1536 = vmatpush.bf16.msra.mxu0 %v1401
    %1537 = vmatpush.bf16.msra.mxu0 %v1400
    %1538 = vmatpush.bf16.msra.mxu0 %v1399
    %1539 = vmatpush.bf16.msra.mxu0 %v1398
    %1540 = vmatpush.bf16.msra.mxu0 %v1397
    %1541 = vmatpush.bf16.msra.mxu0 %v1396
    %1542 = vmatpush.bf16.msra.mxu0 %v1395
    %1543 = vmatpush.bf16.msra.mxu0 %v1394
    %1544 = vmatmul.bf16.gmra.mxu0 %v1005
    %v1545 = vpop.f32.mrf.mxu0
    %v1546 = vadd.f32 %v1533, %v1545
    %v1547 = vpop.f32.mrf.mxu0
    %1548 = vdwg.mxu0
    %v1549 = vtanh.pop %v1546
    %v1550 = vpack.c.bf16 %v1549, %v1549
    %v1551 = vld [vmem:[#allocation7] sm:$0xf]
    %v1552 = vld [vmem:[#allocation7 + $0x4] sm:$0xf]
    %v1553 = vld [vmem:[#allocation7 + $0x8] sm:$0xf]
    %v1554 = vld [vmem:[#allocation7 + $0xc] sm:$0xf]
    %v1555 = vld [vmem:[#allocation7 + $0x10] sm:$0xf]
    %v1556 = vld [vmem:[#allocation7 + $0x14] sm:$0xf]
    %v1557 = vld [vmem:[#allocation7 + $0x18] sm:$0xf]
    %v1558 = vld [vmem:[#allocation7 + $0x1c] sm:$0xf]
    %v1559 = vld [vmem:[#allocation7 + $0x20] sm:$0xf]
    %v1560 = vld [vmem:[#allocation7 + $0x24] sm:$0xf]
    %v1561 = vld [vmem:[#allocation7 + $0x28] sm:$0xf]
    %v1562 = vld [vmem:[#allocation7 + $0x2c] sm:$0xf]
    %v1563 = vld [vmem:[#allocation7 + $0x30] sm:$0xf]
    %v1564 = vld [vmem:[#allocation7 + $0x34] sm:$0xf]
    %v1565 = vld [vmem:[#allocation7 + $0x38] sm:$0xf]
    %v1566 = vld [vmem:[#allocation7 + $0x3c] sm:$0xf]
    %v1567 = vld [vmem:[%s6] sm:$0x1]
    %v1569 = vperm.slane %v1567, 0
    %v1587 = vunpack.c.l.b16 %v1551
    %v1588 = vunpack.c.l.b16 %v1552
    %v1589 = vunpack.c.l.b16 %v1553
    %v1590 = vunpack.c.l.b16 %v1554
    %v1591 = vunpack.c.l.b16 %v1555
    %v1592 = vunpack.c.l.b16 %v1556
    %v1593 = vunpack.c.l.b16 %v1557
    %v1594 = vunpack.c.l.b16 %v1558
    %v1595 = vunpack.c.l.b16 %v1559
    %v1596 = vunpack.c.l.b16 %v1560
    %v1597 = vunpack.c.l.b16 %v1561
    %v1598 = vunpack.c.l.b16 %v1562
    %v1599 = vunpack.c.l.b16 %v1563
    %v1600 = vunpack.c.l.b16 %v1564
    %v1601 = vunpack.c.l.b16 %v1565
    %v1602 = vunpack.c.l.b16 %v1566
    %v1603 = vpack.c.b16 %v1588, %v1587
    %v1604 = vpack.c.b16 %v1590, %v1589
    %v1605 = vpack.c.b16 %v1592, %v1591
    %v1606 = vpack.c.b16 %v1594, %v1593
    %v1607 = vpack.c.b16 %v1596, %v1595
    %v1608 = vpack.c.b16 %v1598, %v1597
    %v1609 = vpack.c.b16 %v1600, %v1599
    %v1610 = vpack.c.b16 %v1602, %v1601
    %1619 = vmatpush.bf16.msra.mxu0 %v1610
    %1620 = vmatpush.bf16.msra.mxu0 %v1609
    %1621 = vmatpush.bf16.msra.mxu0 %v1608
    %1622 = vmatpush.bf16.msra.mxu0 %v1607
    %1623 = vmatpush.bf16.msra.mxu0 %v1606
    %1624 = vmatpush.bf16.msra.mxu0 %v1605
    %1625 = vmatpush.bf16.msra.mxu0 %v1604
    %1626 = vmatpush.bf16.msra.mxu0 %v1603
    %1627 = vmatmul.bf16.gmra.mxu0 %v1550
    %v1628 = vpop.f32.mrf.mxu0
    %v1629 = vadd.f32 %v1569, %v1628
    %v1630 = vpop.f32.mrf.mxu0
    %1631 = vdwg.mxu0
    %1632 = vst [vmem:[#allocation8] sm:$0x3] %v1629
    // Predicated region
    $region42: #{forward.1} parent=1 // pred_check
      _
    $region43: #{forward.1} parent=1 // pred_check_branch
      %1634 = sbr.rel (0) target = $region45
    $region44: #{forward.1} parent=1 // pred_region
      %1636 = vsyncadd [#allocation4], 0
      %s1638 = sshll.u32 [#allocation8], 4
      %s1639 = int_to_ptr.vmem [resolvable:$true] %s1638
      %s1640 = sshll.u32 %s7, 4
      %s1641 = int_to_ptr.hbm [resolvable:$true] %s1640
      %1643 = dma.vmem_to_hbm [thread:$0]  %s1639, 32, %s1641, [#allocation4]
    $region45: #{forward.1} parent=1 // pred_fallthru
      _
    // Predicated region
    $region46: #{forward.1} parent=1 // pred_check
      _
    $region47: #{forward.1} parent=1 // pred_check_branch
      %1645 = sbr.rel (0) target = $region49
    $region48: #{forward.1} parent=1 // pred_region
      %1647 = dma.done [#allocation4], 32
    $region49: #{forward.1} parent=1 // pred_fallthru
      _
    %1648 = vsyncpa [#allocation3], 1
    %1649 = vsyncpa [#allocation6], 1
    %1650 = vsyncpa [#allocation4], 1

</llo_original>
